<compile_context>
chip_gen: v7x
topology: tpu7x:2x2x1
jax: 0.10.0
libtpu: 0.0.40
codegen_flags: <defaults>
</compile_context>

<pallas_src>
import functools
import numpy as np
import jax
import jax.numpy as jnp
from jax.experimental import pallas as pl
from jax.experimental.pallas import tpu as pltpu

NEG_INF = -1e30          # finite: all-masked (padded) rows stay NaN-free


def _round_up(v, m):
    return (v + m - 1) // m * m


def _pick_vmem_limit():
    # Per-generation scoped-VMEM budget: ~80% of physical VMEM (=> ~51 MiB on v7x,
    # ~100-110 MiB on v5e/v6e), conservative 48 MiB fallback if the query fails.
    try:
        cap = getattr(pltpu.get_tpu_info(), "vmem_capacity_bytes", None)
        if cap:
            return int(min(cap * 0.8, 110 * 1024 * 1024))
    except Exception:
        pass
    return 48 * 1024 * 1024


# ----------------------- kernel 1: fused projection --------------------------
def proj_kernel(x_ref, wcat_ref, xw_ref, sc_ref, attT_ref, *, ho_p):
    # single f32 MXU call (feeds attention scores -> keep full precision here)
    p = jnp.dot(x_ref[...], wcat_ref[...], preferred_element_type=jnp.float32)
    xw_ref[...] = p[:, :ho_p]          # per-head features (+ a ones column per head)
    sc = p[:, ho_p:]                   # [TM, 128]  attention score block  [si | sj | 0]
    sc_ref[...] = sc
    attT_ref[...] = jnp.transpose(sc)  # transposed once on the (otherwise idle) XLU


# --------------- kernel 2: masked attention + 'add' aggregation --------------
def gat_aggregate_kernel(xw_ref, sc_ref, attT_ref, adj_ref, bias_ref,
                         ypre_ref, stats_ref, bnpart_ref, *,
                         heads, out_ch, o_pad, n_valid, negative_slope, fast):
    tm = sc_ref.shape[0]
    mask = adj_ref[...] > 0                                   # int8 adj stripe -> bool
    acc = None
    m_cols, d_cols = [], []
    # static unroll over heads; move heads onto a grid axis if heads grows large
    for h in range(heads):
        si = sc_ref[:, h:h + 1]                               # [TM, 1]  target score
        sjT = attT_ref[heads + h:heads + h + 1, :]            # [1, Np]  source scores
        s = si + sjT                                          # [TM, Np]
        s = jnp.where(s > 0, s, negative_slope * s)           # leaky_relu(0.2)
        s = jnp.where(mask, s, NEG_INF)                       # mask non-edges
        m = jnp.max(s, axis=1, keepdims=True)                 # [TM, 1]
        p = jnp.exp(s - m)                                    # masked -> underflow -> 0
        xh = xw_ref[:, h * o_pad:(h + 1) * o_pad]             # [Np, O_p], col out_ch == 1
        if fast:                                              # bf16 MXU, f32 accumulate
            out_h = jnp.dot(p.astype(jnp.bfloat16), xh.astype(jnp.bfloat16),
                            preferred_element_type=jnp.float32)
        else:
            out_h = jnp.dot(p, xh, preferred_element_type=jnp.float32)
        # ones-column trick: softmax denominator comes out of the matmul for free
        denom = out_h[:, out_ch:out_ch + 1]                   # [TM, 1]
        inv = pl.reciprocal(denom * heads, approx=fast)       # EUP; fold 1/heads in
        acc_h = out_h * inv                                   # deferred normalization
        acc = acc_h if acc is None else acc + acc_h
        m_cols.append(m)
        d_cols.append(denom)

    y = acc + bias_ref[...]                                   # fused bias add
    ypre_ref[...] = y

    # lane-dense (TM, 128) stats block, written once per tile: [m_h .. | denom_h .. | 0]
    pad = jnp.zeros((tm, 128 - 2 * heads), jnp.float32)
    stats_ref[...] = jnp.concatenate(m_cols + d_cols + [pad], axis=1)

    # per-tile BatchNorm partial sums over valid rows (streamed epilogue consumes these)
    rows = jax.lax.broadcasted_iota(jnp.int32, (tm, 1), 0) + pl.program_id(0) * tm
    rmask = (rows < n_valid).astype(jnp.float32)
    ym = y * rmask
    part = jnp.concatenate([jnp.sum(ym, axis=0, keepdims=True),
                            jnp.sum(ym * y, axis=0, keepdims=True)], axis=0)  # [2, O_p]
    bnpart_ref[...] = part[None]


# -------------- kernel 3: streamed BatchNorm1d (batch stats) + ReLU ----------
def bn_relu_kernel(y_ref, bnpart_ref, gamma_ref, beta_ref, out_ref, *, n_valid, eps):
    part = bnpart_ref[...]                                    # [n_tiles, 2, O_p] (tiny)
    inv_n = 1.0 / n_valid
    mu = jnp.sum(part[:, 0, :], axis=0, keepdims=True) * inv_n
    ex2 = jnp.sum(part[:, 1, :], axis=0, keepdims=True) * inv_n
    var = jnp.maximum(ex2 - mu * mu, 0.0)
    yhat = (y_ref[...] - mu) * jax.lax.rsqrt(var + eps) * gamma_ref[...] + beta_ref[...]
    out_ref[...] = jnp.maximum(yhat, 0.0)


# ------------------------------- wrapper -------------------------------------
def gat_layer_forward(x, edge_index, params, *, heads, out_ch,
                      negative_slope=0.2, eps=1e-5, row_tile=128, fast=True):
    x = jnp.asarray(x, jnp.float32)
    N, fin = x.shape
    assert 2 * heads <= 128

    # glue: remove_self_loops + add_self_loops (static host-side bookkeeping)
    ei = np.asarray(edge_index)
    keep = ei[0] != ei[1]
    src = np.concatenate([ei[0][keep], np.arange(N)]).astype(np.int32)
    dst = np.concatenate([ei[1][keep], np.arange(N)]).astype(np.int32)

    # lane-dense padded shapes.  row_tile=128 for small graphs; pick 256-512 on
    # v5e/v6e (128 MiB VMEM) and <=256 on v7x (64 MiB VMEM) for large N.
    tm = row_tile
    n_pad = _round_up(max(N, tm), tm)
    fin_p = _round_up(fin + 1, 128)        # +1: constant-one input feature
    o_pad = _round_up(out_ch + 1, 128)     # +1: per-head ones column carries the denom
    ho_p = heads * o_pad
    att_w = 128                            # score block: [si (H) | sj (H) | zeros]
    n_tiles = n_pad // tm

    # dense adjacency as int8 (quarter the DMA bytes of f32), incl. self loops.
    # NOTE: collapses duplicate/parallel edges (standard dense-adjacency GAT behavior).
    adj_np = np.zeros((n_pad, n_pad), np.int8)
    adj_np[dst, src] = 1
    adj = jnp.asarray(adj_np)

    # fold att_i / att_j and the ones columns into the linear weight -> one fused matmul
    W = np.asarray(params["W"], np.float32)            # [Fin, H*O]  (= lin.weight.T)
    att_i = np.asarray(params["att_i"], np.float32)    # [H, O]
    att_j = np.asarray(params["att_j"], np.float32)    # [H, O]
    w_cat = np.zeros((fin_p, ho_p + att_w), np.float32)
    for h in range(heads):
        w_h = W[:, h * out_ch:(h + 1) * out_ch]
        w_cat[:fin, h * o_pad:h * o_pad + out_ch] = w_h
        w_cat[fin, h * o_pad + out_ch] = 1.0                  # ones column (denominator)
        w_cat[:fin, ho_p + h] = w_h @ att_i[h]                # si column
        w_cat[:fin, ho_p + heads + h] = w_h @ att_j[h]        # sj column
    w_cat = jnp.asarray(w_cat)

    x_pad = jnp.zeros((n_pad, fin_p), jnp.float32)
    x_pad = x_pad.at[:N, :fin].set(x).at[:N, fin].set(1.0)
    bias_p = jnp.zeros((1, o_pad), jnp.float32).at[0, :out_ch].set(
        jnp.asarray(params["bias"], jnp.float32))
    gamma_p = jnp.zeros((1, o_pad), jnp.float32).at[0, :out_ch].set(
        jnp.asarray(params["gamma"], jnp.float32))
    beta_p = jnp.zeros((1, o_pad), jnp.float32).at[0, :out_ch].set(
        jnp.asarray(params["beta"], jnp.float32))

    cparams = pltpu.CompilerParams(
        dimension_semantics=("parallel",),     # row-tile axis -> both TCs (megacore)
        vmem_limit_bytes=_pick_vmem_limit())

    # ---- kernel 1: fused projection, tiled over node rows (f32) ----
    xw, scores, attT = pl.pallas_call(
        functools.partial(proj_kernel, ho_p=ho_p),
        grid=(n_tiles,),
        in_specs=[pl.BlockSpec((tm, fin_p), lambda i: (i, 0)),
                  pl.BlockSpec((fin_p, ho_p + att_w), lambda i: (0, 0))],
        out_specs=(pl.BlockSpec((tm, ho_p), lambda i: (i, 0)),
                   pl.BlockSpec((tm, att_w), lambda i: (i, 0)),
                   pl.BlockSpec((att_w, tm), lambda i: (0, i))),
        out_shape=(jax.ShapeDtypeStruct((n_pad, ho_p), jnp.float32),
                   jax.ShapeDtypeStruct((n_pad, att_w), jnp.float32),
                   jax.ShapeDtypeStruct((att_w, n_pad), jnp.float32)),
        compiler_params=cparams,
    )(x_pad, w_cat)

    # ---- kernel 2: attention + aggregation, tiled over target-row stripes ----
    # Resident blocks: xw (no attention lanes) and attT only; the per-tile si scores
    # arrive as a tiny (tm,128) stripe -> no duplicate full-width proj DMA per step.
    ypre, stats, bnpart = pl.pallas_call(
        functools.partial(gat_aggregate_kernel, heads=heads, out_ch=out_ch,
                          o_pad=o_pad, n_valid=N,
                          negative_slope=negative_slope, fast=fast),
        grid=(n_tiles,),
        in_specs=[pl.BlockSpec((n_pad, ho_p), lambda i: (0, 0)),    # resident xw (sources)
                  pl.BlockSpec((tm, att_w), lambda i: (i, 0)),      # target si stripe
                  pl.BlockSpec((att_w, n_pad), lambda i: (0, 0)),   # resident sj^T rows
                  pl.BlockSpec((tm, n_pad), lambda i: (i, 0)),      # int8 adj row stripe
                  pl.BlockSpec((1, o_pad), lambda i: (0, 0))],      # bias (fused add)
        out_specs=(pl.BlockSpec((tm, o_pad), lambda i: (i, 0)),     # lane-dense ypre
                   pl.BlockSpec((tm, 128), lambda i: (i, 0)),       # lane-dense stats
                   pl.BlockSpec((1, 2, o_pad), lambda i: (i, 0, 0))),  # BN partials
        out_shape=(jax.ShapeDtypeStruct((n_pad, o_pad), jnp.float32),
                   jax.ShapeDtypeStruct((n_pad, 128), jnp.float32),
                   jax.ShapeDtypeStruct((n_tiles, 2, o_pad), jnp.float32)),
        compiler_params=cparams,
    )(xw, scores, attT, adj, bias_p)

    # ---- kernel 3: streamed BN + ReLU, gridded over row tiles, in place of ypre ----
    out_pad = pl.pallas_call(
        functools.partial(bn_relu_kernel, n_valid=float(N), eps=eps),
        grid=(n_tiles,),
        in_specs=[pl.BlockSpec((tm, o_pad), lambda i: (i, 0)),
                  pl.BlockSpec((n_tiles, 2, o_pad), lambda i: (0, 0, 0)),
                  pl.BlockSpec((1, o_pad), lambda i: (0, 0)),
                  pl.BlockSpec((1, o_pad), lambda i: (0, 0))],
        out_specs=pl.BlockSpec((tm, o_pad), lambda i: (i, 0)),
        out_shape=jax.ShapeDtypeStruct((n_pad, o_pad), jnp.float32),
        input_output_aliases={0: 0},
        compiler_params=cparams,
    )(ypre, bnpart, gamma_p, beta_p)

    out = out_pad[:N, :out_ch]

    # per-edge attention weights from per-node stats: E-sized gather; no dense [H,N,N]
    # alpha ever hits HBM.
    src_j, dst_j = jnp.asarray(src), jnp.asarray(dst)
    si = scores[:N, :heads]
    sj = scores[:N, heads:2 * heads]
    m = stats[:N, :heads]
    den = stats[:N, heads:2 * heads]
    e_s = si[dst_j] + sj[src_j]
    e_s = jnp.where(e_s > 0, e_s, negative_slope * e_s)
    att_weight = (jnp.exp(e_s - m[dst_j]) / den[dst_j])[:, :, None]   # [E', H, 1]

    return out, att_weight, np.stack([src, dst])


# ------------- pure-JAX edge-based reference (verification only) -------------
def reference_forward(x, src, dst, params, *, heads, out_ch, eps=1e-5):
    N = x.shape[0]
    xw = (x @ params["W"]).reshape(N, heads, out_ch)
    x_j, x_i = xw[src], xw[dst]
    alpha = (x_i * params["att_i"][None]).sum(-1) + (x_j * params["att_j"][None]).sum(-1)
    alpha = jnp.where(alpha > 0, alpha, 0.2 * alpha)
    amax = jax.ops.segment_max(alpha, dst, num_segments=N)
    ex = jnp.exp(alpha - amax[dst])
    den = jax.ops.segment_sum(ex, dst, num_segments=N)
    alpha_n = ex / den[dst]
    out = jax.ops.segment_sum(x_j * alpha_n[:, :, None], dst, num_segments=N)
    out = out.mean(axis=1) + params["bias"][None, :]
    mu = out.mean(0, keepdims=True)
    var = ((out - mu) ** 2).mean(0, keepdims=True)
    out = (out - mu) / jnp.sqrt(var + eps) * params["gamma"][None, :] + params["beta"][None, :]
    return jnp.maximum(out, 0.0), alpha_n[:, :, None]


if __name__ == "__main__":
    # small shapes consistent with the module: N nodes, in_channel, out_channel, heads
    N, FIN, OUT, H = 16, 8, 32, 2

    key = jax.random.PRNGKey(0)
    k_w, k_ai, k_aj, k_x = jax.random.split(key, 4)

    def glorot(k, shape):
        fan = shape[-2] + shape[-1]
        lim = np.sqrt(6.0 / fan)
        return jax.random.uniform(k, shape, jnp.float32, -lim, lim)

    params = {
        "W": glorot(k_w, (FIN, H * OUT)),          # lin.weight.T
        "att_i": glorot(k_ai, (H, OUT)),
        "att_j": glorot(k_aj, (H, OUT)),
        "bias": jnp.zeros((OUT,), jnp.float32),    # zeros() init in module
        "gamma": jnp.ones((OUT,), jnp.float32),    # BatchNorm1d defaults
        "beta": jnp.zeros((OUT,), jnp.float32),
    }

    x = jax.random.normal(k_x, (N, FIN), jnp.float32)
    # deterministic ring graph (both directions), no self loops
    s = np.arange(N)
    edge_index = np.stack([np.concatenate([s, (s + 1) % N]),
                           np.concatenate([(s + 1) % N, s])]).astype(np.int32)

    # ---- strict path: f32 MXU + exact reciprocal -> validates semantics at 1e-3 ----
    out, att_weight, new_ei = gat_layer_forward(x, edge_index, params,
                                                heads=H, out_ch=OUT, fast=False)
    out = jax.block_until_ready(out)
    att_weight = jax.block_until_ready(att_weight)

    ref_out, ref_alpha = reference_forward(x, jnp.asarray(new_ei[0]),
                                           jnp.asarray(new_ei[1]), params,
                                           heads=H, out_ch=OUT)
    np.testing.assert_allclose(np.asarray(out), np.asarray(ref_out),
                               rtol=1e-3, atol=1e-3)
    np.testing.assert_allclose(np.asarray(att_weight), np.asarray(ref_alpha),
                               rtol=1e-3, atol=1e-3)

    # ---- fast path: bf16 MXU operands (f32 accumulate) + approx reciprocal ----
    out_f, att_f, _ = gat_layer_forward(x, edge_index, params,
                                        heads=H, out_ch=OUT, fast=True)
    out_f = jax.block_until_ready(out_f)
    att_f = jax.block_until_ready(att_f)
    np.testing.assert_allclose(np.asarray(out_f), np.asarray(ref_out),
                               rtol=2e-2, atol=2e-2)
    np.testing.assert_allclose(np.asarray(att_f), np.asarray(ref_alpha),
                               rtol=2e-2, atol=2e-2)

    print("KERNEL_OK")
</pallas_src>

<mosaic_0001>
module attributes {stable_mosaic.version = 11 : i64} {
  func.func @proj_kernel(%arg0: i32, %arg1: memref<128x128xf32, #tpu.memory_space<vmem>>, %arg2: memref<128x384xf32, #tpu.memory_space<vmem>>, %arg3: memref<128x256xf32, #tpu.memory_space<vmem>>, %arg4: memref<128x128xf32, #tpu.memory_space<vmem>>, %arg5: memref<128x128xf32, #tpu.memory_space<vmem>>) attributes {dimension_semantics = [#tpu.dimension_semantics<parallel>], iteration_bounds = array<i64: 1>, scalar_prefetch = 0 : i64, scratch_operands = 0 : i64, tpu.core_type = #tpu.core_type<tc>, window_params = [{transform_indices = @transform_0, window_bounds = array<i64: 128, 128>}, {pipeline_mode = #tpu.pipeline_mode<synchronous>, transform_indices = @transform_1, window_bounds = array<i64: 128, 384>}, {transform_indices = @transform_2, window_bounds = array<i64: 128, 256>}, {transform_indices = @transform_3, window_bounds = array<i64: 128, 128>}, {transform_indices = @transform_4, window_bounds = array<i64: 128, 128>}]} {
    %c0 = arith.constant 0 : index
    %c0_0 = arith.constant 0 : index
    %0 = vector.load %arg1[%c0, %c0_0] : memref<128x128xf32, #tpu.memory_space<vmem>>, vector<128x128xf32>
    %c0_1 = arith.constant 0 : index
    %c0_2 = arith.constant 0 : index
    %1 = vector.load %arg2[%c0_1, %c0_2] : memref<128x384xf32, #tpu.memory_space<vmem>>, vector<128x384xf32>
    %cst = arith.constant dense<0.000000e+00> : vector<128x384xf32>
    %2 = tpu.matmul %0, %1, %cst {dimension_numbers = #tpu.dot_dimension_numbers<[1], [0], [0], [1], [0, 0, 1, 1], [], []>} : vector<128x128xf32>, vector<128x384xf32>, vector<128x384xf32> -> vector<128x384xf32>
    %3 = vector.extract_strided_slice %2 {offsets = [0, 0], sizes = [128, 256], strides = [1, 1]} : vector<128x384xf32> to vector<128x256xf32>
    %c0_3 = arith.constant 0 : index
    %c0_4 = arith.constant 0 : index
    %4 = vector.load %arg3[%c0_3, %c0_4] : memref<128x256xf32, #tpu.memory_space<vmem>>, vector<128x256xf32>
    tpu.vector_store %arg3[%c0_3, %c0_4], %3 {strides = array<i32>} : memref<128x256xf32, #tpu.memory_space<vmem>>, vector<128x256xf32>,
    %5 = vector.extract_strided_slice %2 {offsets = [0, 256], sizes = [128, 128], strides = [1, 1]} : vector<128x384xf32> to vector<128x128xf32>
    %c0_5 = arith.constant 0 : index
    %c0_6 = arith.constant 0 : index
    %6 = vector.load %arg4[%c0_5, %c0_6] : memref<128x128xf32, #tpu.memory_space<vmem>>, vector<128x128xf32>
    tpu.vector_store %arg4[%c0_5, %c0_6], %5 {strides = array<i32>} : memref<128x128xf32, #tpu.memory_space<vmem>>, vector<128x128xf32>,
    %7 = tpu.transpose %5, [1, 0] : vector<128x128xf32> -> vector<128x128xf32>
    %c0_7 = arith.constant 0 : index
    %c0_8 = arith.constant 0 : index
    %8 = vector.load %arg5[%c0_7, %c0_8] : memref<128x128xf32, #tpu.memory_space<vmem>>, vector<128x128xf32>
    tpu.vector_store %arg5[%c0_7, %c0_8], %7 {strides = array<i32>} : memref<128x128xf32, #tpu.memory_space<vmem>>, vector<128x128xf32>,
    return
  }
  func.func @transform_0(%arg0: i32) -> (i32, i32) {
    %c0_i32 = arith.constant 0 : i32
    %c0_i32_0 = arith.constant 0 : i32
    return %arg0, %c0_i32 : i32, i32
  }
  func.func @transform_1(%arg0: i32) -> (i32, i32) {
    %c0_i32 = arith.constant 0 : i32
    %c0_i32_0 = arith.constant 0 : i32
    %c0_i32_1 = arith.constant 0 : i32
    return %c0_i32, %c0_i32_0 : i32, i32
  }
  func.func @transform_2(%arg0: i32) -> (i32, i32) {
    %c0_i32 = arith.constant 0 : i32
    %c0_i32_0 = arith.constant 0 : i32
    return %arg0, %c0_i32 : i32, i32
  }
  func.func @transform_3(%arg0: i32) -> (i32, i32) {
    %c0_i32 = arith.constant 0 : i32
    %c0_i32_0 = arith.constant 0 : i32
    return %arg0, %c0_i32 : i32, i32
  }
  func.func @transform_4(%arg0: i32) -> (i32, i32) {
    %c0_i32 = arith.constant 0 : i32
    %c0_i32_0 = arith.constant 0 : i32
    return %c0_i32, %arg0 : i32, i32
  }
}

</mosaic_0001>

<llo_original>
// kernel: tpu_custom_call.1
$region0: #{tpu_custom_call.1}
  #allocation0 [shape = 'u32[]', space=smem, size = 0x4, offset = 0x4, fixed_abs, tag = 'smem constant byte address 0x4 - core index']
  #allocation1 [shape = 'u32[144,128]{1,0:T(1,128)}', space=vmem, size = 0x12000, scoped, tag = 'internal scratch']
  %s0 = inlined_call_operand.hbm [shape: f32[128,128], index: 0, kind: input, shape index: {}]
  %s1 = inlined_call_operand.hbm [shape: f32[128,384], index: 1, kind: input, shape index: {}]
  %s2 = inlined_call_operand.hbm [shape: f32[128,256], index: 2, kind: output, shape index: {0}]
  %s3 = inlined_call_operand.hbm [shape: f32[128,128], index: 3, kind: output, shape index: {1}]
  %s4 = inlined_call_operand.hbm [shape: f32[128,128], index: 4, kind: output, shape index: {2}]
  %5 = xla_tuple %s2, %s3, %s4
  %s6 = sld [smem:[#allocation0]]
  $region42: #{tpu_custom_call.1} parent=0
    _
  %s8 = ssub.s32 1, %s6
  %s9 = scalar_select 0, %s8, %s6
  $region1: #{tpu_custom_call.1} parent=0
    #allocation2 [shape = 'u8[65536]{0}', space=vmem, size = 0x10000, scoped, tag = 'input window, operand 0, single buffered']
    #allocation3 [shape = 's32[1]{0}', space=sflag, size = 0x4, scoped, tag = 'scoped memory for tpu_custom_call.1']
    #allocation4 [shape = 's32[1]{0}', space=sflag, size = 0x4, scoped, tag = 'scoped memory for tpu_custom_call.1']
    #allocation5 [shape = 'u8[196608]{0}', space=vmem, size = 0x30000, scoped, tag = 'input window, operand 1, single buffered']
    #allocation6 [shape = 's32[1]{0}', space=sflag, size = 0x4, scoped, tag = 'scoped memory for tpu_custom_call.1']
    #allocation7 [shape = 'u8[131072]{0}', space=vmem, size = 0x20000, scoped, tag = 'output window, operand 0, single buffered']
    #allocation8 [shape = 'u8[65536]{0}', space=vmem, size = 0x10000, scoped, tag = 'output window, operand 1, single buffered']
    #allocation9 [shape = 's32[1]{0}', space=sflag, size = 0x4, scoped, tag = 'scoped memory for tpu_custom_call.1']
    #allocation10 [shape = 'u8[65536]{0}', space=vmem, size = 0x10000, scoped, tag = 'output window, operand 2, single buffered']
    %10 = vsyncpa [#allocation3], 0
    %11 = vsyncpa [#allocation6], 0
    %12 = vsyncpa [#allocation4], 0
    %13 = vsyncpa [#allocation9], 0
    // Predicated region
    $region2: #{tpu_custom_call.1} parent=1 // pred_check
      _
    $region3: #{tpu_custom_call.1} parent=1 // pred_check_branch
      %15 = sbr.rel (0) target = $region5
    $region4: #{tpu_custom_call.1} parent=1 // pred_region
      %s17 = ssub.s32 2048, 2048
      %18 = vsyncadd [#allocation3], %s17
      %s19 = sshll.u32 [#allocation2], 4
      %s20 = int_to_ptr.vmem [resolvable:$true] %s19
      %25 = dma.hbm_to_vmem [thread:$0]  %s0, 2048, %s20, [#allocation3], 128, 128, 8
    $region5: #{tpu_custom_call.1} parent=1 // pred_fallthru
      _
    // Predicated region
    $region6: #{tpu_custom_call.1} parent=1 // pred_check
      _
    $region7: #{tpu_custom_call.1} parent=1 // pred_check_branch
      %27 = sbr.rel (0) target = $region9
    $region8: #{tpu_custom_call.1} parent=1 // pred_region
      %s29 = ssub.s32 6144, 6144
      %30 = vsyncadd [#allocation6], %s29
      %s31 = sshll.u32 [#allocation5], 4
      %s32 = int_to_ptr.vmem [resolvable:$true] %s31
      %37 = dma.hbm_to_vmem [thread:$0]  %s1, 6144, %s32, [#allocation6], 384, 384, 24
    $region9: #{tpu_custom_call.1} parent=1 // pred_fallthru
      _
    // Predicated region
    $region10: #{tpu_custom_call.1} parent=1 // pred_check
      _
    $region11: #{tpu_custom_call.1} parent=1 // pred_check_branch
      %39 = sbr.rel (0) target = $region13
    $region12: #{tpu_custom_call.1} parent=1 // pred_region
      %40 = dma.done [#allocation3], 2048
    $region13: #{tpu_custom_call.1} parent=1 // pred_fallthru
      _
    // Predicated region
    $region14: #{tpu_custom_call.1} parent=1 // pred_check
      _
    $region15: #{tpu_custom_call.1} parent=1 // pred_check_branch
      %42 = sbr.rel (0) target = $region17
    $region16: #{tpu_custom_call.1} parent=1 // pred_region
      %43 = dma.done [#allocation6], 6144
    $region17: #{tpu_custom_call.1} parent=1 // pred_fallthru
      _
    %v44 = vld [vmem:[#allocation2] sm:$0xff]
    %v45 = vld [vmem:[#allocation2 + $0x8] sm:$0xff]
    %v46 = vld [vmem:[#allocation2 + $0x10] sm:$0xff]
    %v47 = vld [vmem:[#allocation2 + $0x18] sm:$0xff]
    %v48 = vld [vmem:[#allocation2 + $0x20] sm:$0xff]
    %v49 = vld [vmem:[#allocation2 + $0x28] sm:$0xff]
    %v50 = vld [vmem:[#allocation2 + $0x30] sm:$0xff]
    %v51 = vld [vmem:[#allocation2 + $0x38] sm:$0xff]
    %v52 = vld [vmem:[#allocation2 + $0x40] sm:$0xff]
    %v53 = vld [vmem:[#allocation2 + $0x48] sm:$0xff]
    %v54 = vld [vmem:[#allocation2 + $0x50] sm:$0xff]
    %v55 = vld [vmem:[#allocation2 + $0x58] sm:$0xff]
    %v56 = vld [vmem:[#allocation2 + $0x60] sm:$0xff]
    %v57 = vld [vmem:[#allocation2 + $0x68] sm:$0xff]
    %v58 = vld [vmem:[#allocation2 + $0x70] sm:$0xff]
    %v59 = vld [vmem:[#allocation2 + $0x78] sm:$0xff]
    %v60 = vld [vmem:[#allocation5] sm:$0xff]
    %v61 = vld [vmem:[#allocation5 + $0x8] sm:$0xff]
    %v62 = vld [vmem:[#allocation5 + $0x10] sm:$0xff]
    %v63 = vld [vmem:[#allocation5 + $0x18] sm:$0xff]
    %v64 = vld [vmem:[#allocation5 + $0x20] sm:$0xff]
    %v65 = vld [vmem:[#allocation5 + $0x28] sm:$0xff]
    %v66 = vld [vmem:[#allocation5 + $0x30] sm:$0xff]
    %v67 = vld [vmem:[#allocation5 + $0x38] sm:$0xff]
    %v68 = vld [vmem:[#allocation5 + $0x40] sm:$0xff]
    %v69 = vld [vmem:[#allocation5 + $0x48] sm:$0xff]
    %v70 = vld [vmem:[#allocation5 + $0x50] sm:$0xff]
    %v71 = vld [vmem:[#allocation5 + $0x58] sm:$0xff]
    %v72 = vld [vmem:[#allocation5 + $0x60] sm:$0xff]
    %v73 = vld [vmem:[#allocation5 + $0x68] sm:$0xff]
    %v74 = vld [vmem:[#allocation5 + $0x70] sm:$0xff]
    %v75 = vld [vmem:[#allocation5 + $0x78] sm:$0xff]
    %v76 = vld [vmem:[#allocation5 + $0x80] sm:$0xff]
    %v77 = vld [vmem:[#allocation5 + $0x88] sm:$0xff]
    %v78 = vld [vmem:[#allocation5 + $0x90] sm:$0xff]
    %v79 = vld [vmem:[#allocation5 + $0x98] sm:$0xff]
    %v80 = vld [vmem:[#allocation5 + $0xa0] sm:$0xff]
    %v81 = vld [vmem:[#allocation5 + $0xa8] sm:$0xff]
    %v82 = vld [vmem:[#allocation5 + $0xb0] sm:$0xff]
    %v83 = vld [vmem:[#allocation5 + $0xb8] sm:$0xff]
    %v84 = vld [vmem:[#allocation5 + $0xc0] sm:$0xff]
    %v85 = vld [vmem:[#allocation5 + $0xc8] sm:$0xff]
    %v86 = vld [vmem:[#allocation5 + $0xd0] sm:$0xff]
    %v87 = vld [vmem:[#allocation5 + $0xd8] sm:$0xff]
    %v88 = vld [vmem:[#allocation5 + $0xe0] sm:$0xff]
    %v89 = vld [vmem:[#allocation5 + $0xe8] sm:$0xff]
    %v90 = vld [vmem:[#allocation5 + $0xf0] sm:$0xff]
    %v91 = vld [vmem:[#allocation5 + $0xf8] sm:$0xff]
    %v92 = vld [vmem:[#allocation5 + $0x100] sm:$0xff]
    %v93 = vld [vmem:[#allocation5 + $0x108] sm:$0xff]
    %v94 = vld [vmem:[#allocation5 + $0x110] sm:$0xff]
    %v95 = vld [vmem:[#allocation5 + $0x118] sm:$0xff]
    %v96 = vld [vmem:[#allocation5 + $0x120] sm:$0xff]
    %v97 = vld [vmem:[#allocation5 + $0x128] sm:$0xff]
    %v98 = vld [vmem:[#allocation5 + $0x130] sm:$0xff]
    %v99 = vld [vmem:[#allocation5 + $0x138] sm:$0xff]
    %v100 = vld [vmem:[#allocation5 + $0x140] sm:$0xff]
    %v101 = vld [vmem:[#allocation5 + $0x148] sm:$0xff]
    %v102 = vld [vmem:[#allocation5 + $0x150] sm:$0xff]
    %v103 = vld [vmem:[#allocation5 + $0x158] sm:$0xff]
    %v104 = vld [vmem:[#allocation5 + $0x160] sm:$0xff]
    %v105 = vld [vmem:[#allocation5 + $0x168] sm:$0xff]
    %v106 = vld [vmem:[#allocation5 + $0x170] sm:$0xff]
    %v107 = vld [vmem:[#allocation5 + $0x178] sm:$0xff]
    %108 = vmatprep.subr.mxu0 %v61
    %109 = vmatpush1.msra.mxu0 %v60
    %110 = vmatprep.subr.mxu0 %v64
    %111 = vmatpush1.msra.mxu0 %v63
    %112 = vmatprep.subr.mxu0 %v67
    %113 = vmatpush1.msra.mxu0 %v66
    %114 = vmatprep.subr.mxu0 %v70
    %115 = vmatpush1.msra.mxu0 %v69
    %116 = vmatprep.subr.mxu0 %v73
    %117 = vmatpush1.msra.mxu0 %v72
    %118 = vmatprep.subr.mxu0 %v76
    %119 = vmatpush1.msra.mxu0 %v75
    %120 = vmatprep.subr.mxu0 %v79
    %121 = vmatpush1.msra.mxu0 %v78
    %122 = vmatprep.subr.mxu0 %v82
    %123 = vmatpush1.msra.mxu0 %v81
    %124 = vmatprep.subr.mxu0 %v85
    %125 = vmatpush1.msra.mxu0 %v84
    %126 = vmatprep.subr.mxu0 %v88
    %127 = vmatpush1.msra.mxu0 %v87
    %128 = vmatprep.subr.mxu0 %v91
    %129 = vmatpush1.msra.mxu0 %v90
    %130 = vmatprep.subr.mxu0 %v94
    %131 = vmatpush1.msra.mxu0 %v93
    %132 = vmatprep.subr.mxu0 %v97
    %133 = vmatpush1.msra.mxu0 %v96
    %134 = vmatprep.subr.mxu0 %v100
    %135 = vmatpush1.msra.mxu0 %v99
    %136 = vmatprep.subr.mxu0 %v103
    %137 = vmatpush1.msra.mxu0 %v102
    %138 = vmatprep.subr.mxu0 %v106
    %139 = vmatpush1.msra.mxu0 %v105
    %140 = vmatprep.subr.mxu0 0.0
    %141 = vmatpush1.msra.mxu0 0.0
    %142 = vmatprep.subr.mxu0 0.0
    %143 = vmatpush1.msra.mxu0 0.0
    %144 = vmatprep.subr.mxu0 0.0
    %145 = vmatpush1.msra.mxu0 0.0
    %146 = vmatprep.subr.mxu0 0.0
    %147 = vmatpush1.msra.mxu0 0.0
    %148 = vmatprep.subr.mxu0 0.0
    %149 = vmatpush1.msra.mxu0 0.0
    %150 = vmatprep.subr.mxu0 0.0
    %151 = vmatpush1.msra.mxu0 0.0
    %152 = vmatprep.subr.mxu0 0.0
    %153 = vmatpush1.msra.mxu0 0.0
    %154 = vmatprep.subr.mxu0 0.0
    %155 = vmatpush1.msra.mxu0 0.0
    %156 = vmatprep.subr.mxu0 0.0
    %157 = vmatpush1.msra.mxu0 0.0
    %158 = vmatprep.subr.mxu0 0.0
    %159 = vmatpush1.msra.mxu0 0.0
    %160 = vmatprep.subr.mxu0 0.0
    %161 = vmatpush1.msra.mxu0 0.0
    %162 = vmatprep.subr.mxu0 0.0
    %163 = vmatpush1.msra.mxu0 0.0
    %164 = vmatprep.subr.mxu0 0.0
    %165 = vmatpush1.msra.mxu0 0.0
    %166 = vmatprep.subr.mxu0 0.0
    %167 = vmatpush1.msra.mxu0 0.0
    %168 = vmatprep.subr.mxu0 0.0
    %169 = vmatpush1.msra.mxu0 0.0
    %170 = vmatprep.subr.mxu0 0.0
    %171 = vmatpush1.msra.mxu0 0.0
    %172 = vmatprep.mubr.f32.mxu0 0.0
    %173 = vmatmul.mubr.f32.gmra.mrb[0].mxu0 %v44
    %v174 = vpop.f32.mrb[0].mxu0
    %v175 = vadd.f32 0.0, %v174
    %v176 = vpop.f32.mrb[0].mxu0
    %v177 = vadd.f32 0.0, %v176
    %178 = vmatprep.mubr.f32.mxu0 0.0
    %179 = vmatmul.mubr.f32.gmra.mrb[0].mxu0 %v45
    %v180 = vpop.f32.mrb[0].mxu0
    %v181 = vadd.f32 0.0, %v180
    %v182 = vpop.f32.mrb[0].mxu0
    %v183 = vadd.f32 0.0, %v182
    %184 = vmatprep.mubr.f32.mxu0 0.0
    %185 = vmatmul.mubr.f32.gmra.mrb[0].mxu0 %v46
    %v186 = vpop.f32.mrb[0].mxu0
    %v187 = vadd.f32 0.0, %v186
    %v188 = vpop.f32.mrb[0].mxu0
    %v189 = vadd.f32 0.0, %v188
    %190 = vmatprep.mubr.f32.mxu0 0.0
    %191 = vmatmul.mubr.f32.gmra.mrb[0].mxu0 %v47
    %v192 = vpop.f32.mrb[0].mxu0
    %v193 = vadd.f32 0.0, %v192
    %v194 = vpop.f32.mrb[0].mxu0
    %v195 = vadd.f32 0.0, %v194
    %196 = vmatprep.mubr.f32.mxu0 0.0
    %197 = vmatmul.mubr.f32.gmra.mrb[0].mxu0 %v48
    %v198 = vpop.f32.mrb[0].mxu0
    %v199 = vadd.f32 0.0, %v198
    %v200 = vpop.f32.mrb[0].mxu0
    %v201 = vadd.f32 0.0, %v200
    %202 = vmatprep.mubr.f32.mxu0 0.0
    %203 = vmatmul.mubr.f32.gmra.mrb[0].mxu0 %v49
    %v204 = vpop.f32.mrb[0].mxu0
    %v205 = vadd.f32 0.0, %v204
    %v206 = vpop.f32.mrb[0].mxu0
    %v207 = vadd.f32 0.0, %v206
    %208 = vmatprep.mubr.f32.mxu0 0.0
    %209 = vmatmul.mubr.f32.gmra.mrb[0].mxu0 %v50
    %v210 = vpop.f32.mrb[0].mxu0
    %v211 = vadd.f32 0.0, %v210
    %v212 = vpop.f32.mrb[0].mxu0
    %v213 = vadd.f32 0.0, %v212
    %214 = vmatprep.mubr.f32.mxu0 0.0
    %215 = vmatmul.mubr.f32.gmra.mrb[0].mxu0 %v51
    %v216 = vpop.f32.mrb[0].mxu0
    %v217 = vadd.f32 0.0, %v216
    %v218 = vpop.f32.mrb[0].mxu0
    %v219 = vadd.f32 0.0, %v218
    %220 = vmatprep.mubr.f32.mxu0 0.0
    %221 = vmatmul.mubr.f32.gmra.mrb[0].mxu0 %v52
    %v222 = vpop.f32.mrb[0].mxu0
    %v223 = vadd.f32 0.0, %v222
    %v224 = vpop.f32.mrb[0].mxu0
    %v225 = vadd.f32 0.0, %v224
    %226 = vmatprep.mubr.f32.mxu0 0.0
    %227 = vmatmul.mubr.f32.gmra.mrb[0].mxu0 %v53
    %v228 = vpop.f32.mrb[0].mxu0
    %v229 = vadd.f32 0.0, %v228
    %v230 = vpop.f32.mrb[0].mxu0
    %v231 = vadd.f32 0.0, %v230
    %232 = vmatprep.mubr.f32.mxu0 0.0
    %233 = vmatmul.mubr.f32.gmra.mrb[0].mxu0 %v54
    %v234 = vpop.f32.mrb[0].mxu0
    %v235 = vadd.f32 0.0, %v234
    %v236 = vpop.f32.mrb[0].mxu0
    %v237 = vadd.f32 0.0, %v236
    %238 = vmatprep.mubr.f32.mxu0 0.0
    %239 = vmatmul.mubr.f32.gmra.mrb[0].mxu0 %v55
    %v240 = vpop.f32.mrb[0].mxu0
    %v241 = vadd.f32 0.0, %v240
    %v242 = vpop.f32.mrb[0].mxu0
    %v243 = vadd.f32 0.0, %v242
    %244 = vmatprep.mubr.f32.mxu0 0.0
    %245 = vmatmul.mubr.f32.gmra.mrb[0].mxu0 %v56
    %v246 = vpop.f32.mrb[0].mxu0
    %v247 = vadd.f32 0.0, %v246
    %v248 = vpop.f32.mrb[0].mxu0
    %v249 = vadd.f32 0.0, %v248
    %250 = vmatprep.mubr.f32.mxu0 0.0
    %251 = vmatmul.mubr.f32.gmra.mrb[0].mxu0 %v57
    %v252 = vpop.f32.mrb[0].mxu0
    %v253 = vadd.f32 0.0, %v252
    %v254 = vpop.f32.mrb[0].mxu0
    %v255 = vadd.f32 0.0, %v254
    %256 = vmatprep.mubr.f32.mxu0 0.0
    %257 = vmatmul.mubr.f32.gmra.mrb[0].mxu0 %v58
    %v258 = vpop.f32.mrb[0].mxu0
    %v259 = vadd.f32 0.0, %v258
    %v260 = vpop.f32.mrb[0].mxu0
    %v261 = vadd.f32 0.0, %v260
    %262 = vmatprep.mubr.f32.mxu0 0.0
    %263 = vmatmul.mubr.f32.gmra.mrb[0].mxu0 %v59
    %v264 = vpop.f32.mrb[0].mxu0
    %v265 = vadd.f32 0.0, %v264
    %v266 = vpop.f32.mrb[0].mxu0
    %v267 = vadd.f32 0.0, %v266
    %268 = vdwg.mxu0
    %269 = vmatprep.subr.mxu0 0.0
    %270 = vmatpush1.msra.mxu0 %v62
    %271 = vmatprep.subr.mxu0 0.0
    %272 = vmatpush1.msra.mxu0 %v65
    %273 = vmatprep.subr.mxu0 0.0
    %274 = vmatpush1.msra.mxu0 %v68
    %275 = vmatprep.subr.mxu0 0.0
    %276 = vmatpush1.msra.mxu0 %v71
    %277 = vmatprep.subr.mxu0 0.0
    %278 = vmatpush1.msra.mxu0 %v74
    %279 = vmatprep.subr.mxu0 0.0
    %280 = vmatpush1.msra.mxu0 %v77
    %281 = vmatprep.subr.mxu0 0.0
    %282 = vmatpush1.msra.mxu0 %v80
    %283 = vmatprep.subr.mxu0 0.0
    %284 = vmatpush1.msra.mxu0 %v83
    %285 = vmatprep.subr.mxu0 0.0
    %286 = vmatpush1.msra.mxu0 %v86
    %287 = vmatprep.subr.mxu0 0.0
    %288 = vmatpush1.msra.mxu0 %v89
    %289 = vmatprep.subr.mxu0 0.0
    %290 = vmatpush1.msra.mxu0 %v92
    %291 = vmatprep.subr.mxu0 0.0
    %292 = vmatpush1.msra.mxu0 %v95
    %293 = vmatprep.subr.mxu0 0.0
    %294 = vmatpush1.msra.mxu0 %v98
    %295 = vmatprep.subr.mxu0 0.0
    %296 = vmatpush1.msra.mxu0 %v101
    %297 = vmatprep.subr.mxu0 0.0
    %298 = vmatpush1.msra.mxu0 %v104
    %299 = vmatprep.subr.mxu0 0.0
    %300 = vmatpush1.msra.mxu0 %v107
    %301 = vmatprep.subr.mxu0 0.0
    %302 = vmatpush1.msra.mxu0 0.0
    %303 = vmatprep.subr.mxu0 0.0
    %304 = vmatpush1.msra.mxu0 0.0
    %305 = vmatprep.subr.mxu0 0.0
    %306 = vmatpush1.msra.mxu0 0.0
    %307 = vmatprep.subr.mxu0 0.0
    %308 = vmatpush1.msra.mxu0 0.0
    %309 = vmatprep.subr.mxu0 0.0
    %310 = vmatpush1.msra.mxu0 0.0
    %311 = vmatprep.subr.mxu0 0.0
    %312 = vmatpush1.msra.mxu0 0.0
    %313 = vmatprep.subr.mxu0 0.0
    %314 = vmatpush1.msra.mxu0 0.0
    %315 = vmatprep.subr.mxu0 0.0
    %316 = vmatpush1.msra.mxu0 0.0
    %317 = vmatprep.subr.mxu0 0.0
    %318 = vmatpush1.msra.mxu0 0.0
    %319 = vmatprep.subr.mxu0 0.0
    %320 = vmatpush1.msra.mxu0 0.0
    %321 = vmatprep.subr.mxu0 0.0
    %322 = vmatpush1.msra.mxu0 0.0
    %323 = vmatprep.subr.mxu0 0.0
    %324 = vmatpush1.msra.mxu0 0.0
    %325 = vmatprep.subr.mxu0 0.0
    %326 = vmatpush1.msra.mxu0 0.0
    %327 = vmatprep.subr.mxu0 0.0
    %328 = vmatpush1.msra.mxu0 0.0
    %329 = vmatprep.subr.mxu0 0.0
    %330 = vmatpush1.msra.mxu0 0.0
    %331 = vmatprep.subr.mxu0 0.0
    %332 = vmatpush1.msra.mxu0 0.0
    %333 = vmatprep.mubr.f32.mxu0 0.0
    %334 = vmatmul.mubr.f32.gmra.mrb[0].mxu0 %v44
    %v335 = vpop.f32.mrb[0].mxu0
    %v336 = vadd.f32 0.0, %v335
    %v337 = vpop.f32.mrb[0].mxu0
    %338 = vmatprep.mubr.f32.mxu0 0.0
    %339 = vmatmul.mubr.f32.gmra.mrb[0].mxu0 %v45
    %v340 = vpop.f32.mrb[0].mxu0
    %v341 = vadd.f32 0.0, %v340
    %v342 = vpop.f32.mrb[0].mxu0
    %343 = vmatprep.mubr.f32.mxu0 0.0
    %344 = vmatmul.mubr.f32.gmra.mrb[0].mxu0 %v46
    %v345 = vpop.f32.mrb[0].mxu0
    %v346 = vadd.f32 0.0, %v345
    %v347 = vpop.f32.mrb[0].mxu0
    %348 = vmatprep.mubr.f32.mxu0 0.0
    %349 = vmatmul.mubr.f32.gmra.mrb[0].mxu0 %v47
    %v350 = vpop.f32.mrb[0].mxu0
    %v351 = vadd.f32 0.0, %v350
    %v352 = vpop.f32.mrb[0].mxu0
    %353 = vmatprep.mubr.f32.mxu0 0.0
    %354 = vmatmul.mubr.f32.gmra.mrb[0].mxu0 %v48
    %v355 = vpop.f32.mrb[0].mxu0
    %v356 = vadd.f32 0.0, %v355
    %v357 = vpop.f32.mrb[0].mxu0
    %358 = vmatprep.mubr.f32.mxu0 0.0
    %359 = vmatmul.mubr.f32.gmra.mrb[0].mxu0 %v49
    %v360 = vpop.f32.mrb[0].mxu0
    %v361 = vadd.f32 0.0, %v360
    %v362 = vpop.f32.mrb[0].mxu0
    %363 = vmatprep.mubr.f32.mxu0 0.0
    %364 = vmatmul.mubr.f32.gmra.mrb[0].mxu0 %v50
    %v365 = vpop.f32.mrb[0].mxu0
    %v366 = vadd.f32 0.0, %v365
    %v367 = vpop.f32.mrb[0].mxu0
    %368 = vmatprep.mubr.f32.mxu0 0.0
    %369 = vmatmul.mubr.f32.gmra.mrb[0].mxu0 %v51
    %v370 = vpop.f32.mrb[0].mxu0
    %v371 = vadd.f32 0.0, %v370
    %v372 = vpop.f32.mrb[0].mxu0
    %373 = vmatprep.mubr.f32.mxu0 0.0
    %374 = vmatmul.mubr.f32.gmra.mrb[0].mxu0 %v52
    %v375 = vpop.f32.mrb[0].mxu0
    %v376 = vadd.f32 0.0, %v375
    %v377 = vpop.f32.mrb[0].mxu0
    %378 = vmatprep.mubr.f32.mxu0 0.0
    %379 = vmatmul.mubr.f32.gmra.mrb[0].mxu0 %v53
    %v380 = vpop.f32.mrb[0].mxu0
    %v381 = vadd.f32 0.0, %v380
    %v382 = vpop.f32.mrb[0].mxu0
    %383 = vmatprep.mubr.f32.mxu0 0.0
    %384 = vmatmul.mubr.f32.gmra.mrb[0].mxu0 %v54
    %v385 = vpop.f32.mrb[0].mxu0
    %v386 = vadd.f32 0.0, %v385
    %v387 = vpop.f32.mrb[0].mxu0
    %388 = vmatprep.mubr.f32.mxu0 0.0
    %389 = vmatmul.mubr.f32.gmra.mrb[0].mxu0 %v55
    %v390 = vpop.f32.mrb[0].mxu0
    %v391 = vadd.f32 0.0, %v390
    %v392 = vpop.f32.mrb[0].mxu0
    %393 = vmatprep.mubr.f32.mxu0 0.0
    %394 = vmatmul.mubr.f32.gmra.mrb[0].mxu0 %v56
    %v395 = vpop.f32.mrb[0].mxu0
    %v396 = vadd.f32 0.0, %v395
    %v397 = vpop.f32.mrb[0].mxu0
    %398 = vmatprep.mubr.f32.mxu0 0.0
    %399 = vmatmul.mubr.f32.gmra.mrb[0].mxu0 %v57
    %v400 = vpop.f32.mrb[0].mxu0
    %v401 = vadd.f32 0.0, %v400
    %v402 = vpop.f32.mrb[0].mxu0
    %403 = vmatprep.mubr.f32.mxu0 0.0
    %404 = vmatmul.mubr.f32.gmra.mrb[0].mxu0 %v58
    %v405 = vpop.f32.mrb[0].mxu0
    %v406 = vadd.f32 0.0, %v405
    %v407 = vpop.f32.mrb[0].mxu0
    %408 = vmatprep.mubr.f32.mxu0 0.0
    %409 = vmatmul.mubr.f32.gmra.mrb[0].mxu0 %v59
    %v410 = vpop.f32.mrb[0].mxu0
    %v411 = vadd.f32 0.0, %v410
    %v412 = vpop.f32.mrb[0].mxu0
    %413 = vdwg.mxu0
    %414 = vst [vmem:[#allocation7] sm:$0xff] %v175
    %415 = vst [vmem:[#allocation7 + $0x8] sm:$0xff] %v177
    %416 = vst [vmem:[#allocation7 + $0x10] sm:$0xff] %v181
    %417 = vst [vmem:[#allocation7 + $0x18] sm:$0xff] %v183
    %418 = vst [vmem:[#allocation7 + $0x20] sm:$0xff] %v187
    %419 = vst [vmem:[#allocation7 + $0x28] sm:$0xff] %v189
    %420 = vst [vmem:[#allocation7 + $0x30] sm:$0xff] %v193
    %421 = vst [vmem:[#allocation7 + $0x38] sm:$0xff] %v195
    %422 = vst [vmem:[#allocation7 + $0x40] sm:$0xff] %v199
    %423 = vst [vmem:[#allocation7 + $0x48] sm:$0xff] %v201
    %424 = vst [vmem:[#allocation7 + $0x50] sm:$0xff] %v205
    %425 = vst [vmem:[#allocation7 + $0x58] sm:$0xff] %v207
    %426 = vst [vmem:[#allocation7 + $0x60] sm:$0xff] %v211
    %427 = vst [vmem:[#allocation7 + $0x68] sm:$0xff] %v213
    %428 = vst [vmem:[#allocation7 + $0x70] sm:$0xff] %v217
    %429 = vst [vmem:[#allocation7 + $0x78] sm:$0xff] %v219
    %430 = vst [vmem:[#allocation7 + $0x80] sm:$0xff] %v223
    %431 = vst [vmem:[#allocation7 + $0x88] sm:$0xff] %v225
    %432 = vst [vmem:[#allocation7 + $0x90] sm:$0xff] %v229
    %433 = vst [vmem:[#allocation7 + $0x98] sm:$0xff] %v231
    %434 = vst [vmem:[#allocation7 + $0xa0] sm:$0xff] %v235
    %435 = vst [vmem:[#allocation7 + $0xa8] sm:$0xff] %v237
    %436 = vst [vmem:[#allocation7 + $0xb0] sm:$0xff] %v241
    %437 = vst [vmem:[#allocation7 + $0xb8] sm:$0xff] %v243
    %438 = vst [vmem:[#allocation7 + $0xc0] sm:$0xff] %v247
    %439 = vst [vmem:[#allocation7 + $0xc8] sm:$0xff] %v249
    %440 = vst [vmem:[#allocation7 + $0xd0] sm:$0xff] %v253
    %441 = vst [vmem:[#allocation7 + $0xd8] sm:$0xff] %v255
    %442 = vst [vmem:[#allocation7 + $0xe0] sm:$0xff] %v259
    %443 = vst [vmem:[#allocation7 + $0xe8] sm:$0xff] %v261
    %444 = vst [vmem:[#allocation7 + $0xf0] sm:$0xff] %v265
    %445 = vst [vmem:[#allocation7 + $0xf8] sm:$0xff] %v267
    %446 = vst [vmem:[#allocation8] sm:$0xff] %v336
    %447 = vst [vmem:[#allocation8 + $0x8] sm:$0xff] %v341
    %448 = vst [vmem:[#allocation8 + $0x10] sm:$0xff] %v346
    %449 = vst [vmem:[#allocation8 + $0x18] sm:$0xff] %v351
    %450 = vst [vmem:[#allocation8 + $0x20] sm:$0xff] %v356
    %451 = vst [vmem:[#allocation8 + $0x28] sm:$0xff] %v361
    %452 = vst [vmem:[#allocation8 + $0x30] sm:$0xff] %v366
    %453 = vst [vmem:[#allocation8 + $0x38] sm:$0xff] %v371
    %454 = vst [vmem:[#allocation8 + $0x40] sm:$0xff] %v376
    %455 = vst [vmem:[#allocation8 + $0x48] sm:$0xff] %v381
    %456 = vst [vmem:[#allocation8 + $0x50] sm:$0xff] %v386
    %457 = vst [vmem:[#allocation8 + $0x58] sm:$0xff] %v391
    %458 = vst [vmem:[#allocation8 + $0x60] sm:$0xff] %v396
    %459 = vst [vmem:[#allocation8 + $0x68] sm:$0xff] %v401
    %460 = vst [vmem:[#allocation8 + $0x70] sm:$0xff] %v406
    %461 = vst [vmem:[#allocation8 + $0x78] sm:$0xff] %v411
    %462 = vxpose.xlu0.b32.start [1/16] %v336, 128
    %463 = vxpose.xlu0.b32.cont [2/16] %v341, 128
    %464 = vxpose.xlu0.b32.cont [3/16] %v346, 128
    %465 = vxpose.xlu0.b32.cont [4/16] %v351, 128
    %466 = vxpose.xlu0.b32.cont [5/16] %v356, 128
    %467 = vxpose.xlu0.b32.cont [6/16] %v361, 128
    %468 = vxpose.xlu0.b32.cont [7/16] %v366, 128
    %469 = vxpose.xlu0.b32.cont [8/16] %v371, 128
    %470 = vxpose.xlu0.b32.cont [9/16] %v376, 128
    %471 = vxpose.xlu0.b32.cont [10/16] %v381, 128
    %472 = vxpose.xlu0.b32.cont [11/16] %v386, 128
    %473 = vxpose.xlu0.b32.cont [12/16] %v391, 128
    %474 = vxpose.xlu0.b32.cont [13/16] %v396, 128
    %475 = vxpose.xlu0.b32.cont [14/16] %v401, 128
    %476 = vxpose.xlu0.b32.cont [15/16] %v406, 128
    %477 = vxpose.xlu0.b32.end [16/16] %v411, 128
    %v478 = vpop.trf.xlu0
    %v479 = vpop.trf.xlu0
    %v480 = vpop.trf.xlu0
    %v481 = vpop.trf.xlu0
    %v482 = vpop.trf.xlu0
    %v483 = vpop.trf.xlu0
    %v484 = vpop.trf.xlu0
    %v485 = vpop.trf.xlu0
    %v486 = vpop.trf.xlu0
    %v487 = vpop.trf.xlu0
    %v488 = vpop.trf.xlu0
    %v489 = vpop.trf.xlu0
    %v490 = vpop.trf.xlu0
    %v491 = vpop.trf.xlu0
    %v492 = vpop.trf.xlu0
    %v493 = vpop.trf.xlu0
    %494 = vst [vmem:[#allocation10] sm:$0xff] %v478
    %495 = vst [vmem:[#allocation10 + $0x8] sm:$0xff] %v479
    %496 = vst [vmem:[#allocation10 + $0x10] sm:$0xff] %v480
    %497 = vst [vmem:[#allocation10 + $0x18] sm:$0xff] %v481
    %498 = vst [vmem:[#allocation10 + $0x20] sm:$0xff] %v482
    %499 = vst [vmem:[#allocation10 + $0x28] sm:$0xff] %v483
    %500 = vst [vmem:[#allocation10 + $0x30] sm:$0xff] %v484
    %501 = vst [vmem:[#allocation10 + $0x38] sm:$0xff] %v485
    %502 = vst [vmem:[#allocation10 + $0x40] sm:$0xff] %v486
    %503 = vst [vmem:[#allocation10 + $0x48] sm:$0xff] %v487
    %504 = vst [vmem:[#allocation10 + $0x50] sm:$0xff] %v488
    %505 = vst [vmem:[#allocation10 + $0x58] sm:$0xff] %v489
    %506 = vst [vmem:[#allocation10 + $0x60] sm:$0xff] %v490
    %507 = vst [vmem:[#allocation10 + $0x68] sm:$0xff] %v491
    %508 = vst [vmem:[#allocation10 + $0x70] sm:$0xff] %v492
    %509 = vst [vmem:[#allocation10 + $0x78] sm:$0xff] %v493
    // Predicated region
    $region18: #{tpu_custom_call.1} parent=1 // pred_check
      _
    $region19: #{tpu_custom_call.1} parent=1 // pred_check_branch
      %511 = sbr.rel (0) target = $region21
    $region20: #{tpu_custom_call.1} parent=1 // pred_region
      %s513 = ssub.s32 4096, 4096
      %514 = vsyncadd [#allocation4], %s513
      %s515 = sshll.u32 [#allocation7], 4
      %s516 = int_to_ptr.vmem [resolvable:$true] %s515
      %521 = dma.vmem_to_hbm [thread:$0]  %s516, 4096, %s2, [#allocation4], 256, 256, 16
    $region21: #{tpu_custom_call.1} parent=1 // pred_fallthru
      _
    // Predicated region
    $region22: #{tpu_custom_call.1} parent=1 // pred_check
      _
    $region23: #{tpu_custom_call.1} parent=1 // pred_check_branch
      %523 = sbr.rel (0) target = $region25
    $region24: #{tpu_custom_call.1} parent=1 // pred_region
      %s525 = ssub.s32 2048, 2048
      %526 = vsyncadd [#allocation9], %s525
      %s527 = sshll.u32 [#allocation8], 4
      %s528 = int_to_ptr.vmem [resolvable:$true] %s527
      %533 = dma.vmem_to_hbm [thread:$0]  %s528, 2048, %s3, [#allocation9], 128, 128, 8
    $region25: #{tpu_custom_call.1} parent=1 // pred_fallthru
      _
    // Predicated region
    $region26: #{tpu_custom_call.1} parent=1 // pred_check
      _
    $region27: #{tpu_custom_call.1} parent=1 // pred_check_branch
      %535 = sbr.rel (0) target = $region29
    $region28: #{tpu_custom_call.1} parent=1 // pred_region
      %s537 = ssub.s32 2048, 2048
      %538 = vsyncadd [#allocation9], %s537
      %s539 = sshll.u32 [#allocation10], 4
      %s540 = int_to_ptr.vmem [resolvable:$true] %s539
      %545 = dma.vmem_to_hbm [thread:$0]  %s540, 2048, %s4, [#allocation9], 128, 128, 8
    $region29: #{tpu_custom_call.1} parent=1 // pred_fallthru
      _
    // Predicated region
    $region30: #{tpu_custom_call.1} parent=1 // pred_check
      _
    $region31: #{tpu_custom_call.1} parent=1 // pred_check_branch
      %547 = sbr.rel (0) target = $region33
    $region32: #{tpu_custom_call.1} parent=1 // pred_region
      %548 = dma.done [#allocation4], 4096
    $region33: #{tpu_custom_call.1} parent=1 // pred_fallthru
      _
    // Predicated region
    $region34: #{tpu_custom_call.1} parent=1 // pred_check
      _
    $region35: #{tpu_custom_call.1} parent=1 // pred_check_branch
      %550 = sbr.rel (0) target = $region37
    $region36: #{tpu_custom_call.1} parent=1 // pred_region
      %551 = dma.done [#allocation9], 2048
    $region37: #{tpu_custom_call.1} parent=1 // pred_fallthru
      _
    // Predicated region
    $region38: #{tpu_custom_call.1} parent=1 // pred_check
      _
    $region39: #{tpu_custom_call.1} parent=1 // pred_check_branch
      %553 = sbr.rel (0) target = $region41
    $region40: #{tpu_custom_call.1} parent=1 // pred_region
      %554 = dma.done [#allocation9], 2048
    $region41: #{tpu_custom_call.1} parent=1 // pred_fallthru
      _
    %555 = vsyncpa [#allocation3], 1
    %556 = vsyncpa [#allocation6], 1
    %557 = vsyncpa [#allocation4], 1
    %558 = vsyncpa [#allocation9], 1

</llo_original>
